<compile_context>
chip_gen: v7x
topology: tpu7x:2x2x1
jax: 0.10.0
libtpu: 0.0.40
codegen_flags: <defaults>
</compile_context>

<pallas_src>
import jax
import jax.numpy as jnp
from jax.experimental import pallas as pl
from jax.experimental.pallas import tpu as pltpu


def se_block_kernel(pooled_ref, x_ref, w1t_ref, b1_ref, w2t_ref, b2_ref,
                    w3_ref, out_ref):
    # pooled_ref: (1, Cin)     -- squeezed global-pool vector (x52), row form
    # x_ref:      (Cin, HW)    -- full channels-first feature map
    # w1t_ref:    (Cin, Cmid),  b1_ref: (1, Cmid)
    # w2t_ref:    (Cmid, Cin),  b2_ref: (1, Cin)   [hardsigmoid affine folded in]
    # w3_ref:     (Cout, Cin)
    # out_ref:    (Cout, HW)

    pooled = pooled_ref[...].astype(jnp.float32)                  # (1, Cin)

    # --- squeeze: conv2d18 (1x1, bias) + ReLU -------------------------------
    h = jnp.dot(pooled, w1t_ref[...],
                preferred_element_type=jnp.float32)               # (1, Cmid)
    h = jnp.maximum(h + b1_ref[...], 0.0)

    # --- conv2d19 (1x1, bias) + Hardsigmoid ---------------------------------
    # /6 and +0.5 are pre-folded into w2t / b2, so only the clamp remains.
    g = jnp.dot(h, w2t_ref[...],
                preferred_element_type=jnp.float32)               # (1, Cin)
    g = jnp.clip(g + b2_ref[...], 0.0, 1.0)

    # --- excite fused into conv2d20: (w3 * g) @ x ---------------------------
    w3g = w3_ref[...] * g                                         # (Cout, Cin)
    out_ref[...] = jnp.dot(w3g, x_ref[...].astype(jnp.float32),
                           preferred_element_type=jnp.float32
                           ).astype(out_ref.dtype)                # (Cout, HW)


def prepare_kernel_params(params):
    """One-time repack of PyTorch-native (Cout, Cin) params into kernel layout."""
    w1t = params["w1"].T                                 # (Cin, Cmid)
    b1 = params["b1"].reshape(1, -1)                     # (1, Cmid)
    w2t = params["w2"].T * (1.0 / 6.0)                   # (Cmid, Cin), hsig /6 folded
    b2 = params["b2"].reshape(1, -1) * (1.0 / 6.0) + 0.5  # (1, Cin), hsig +0.5 folded
    w3 = params["w3"]                                    # (Cout, Cin)
    return w1t, b1, w2t, b2, w3


def se_block_forward(x52, x51, params):
    """x52: (1, Cin, 1, 1), x51: (1, Cin, H, W)  [NCHW] -> (1, Cout, H, W)."""
    N, C, H, W = x51.shape
    assert N == 1
    HW = H * W
    Cout, Cin = params["w3"].shape
    assert Cin == C
    Cmid = params["w1"].shape[0]

    w1t, b1, w2t, b2, w3 = prepare_kernel_params(params)

    # Free, contiguous (NCHW) reshapes -- no transposes, no pads, no dtype copies.
    pooled = x52.reshape(1, C)                           # (1, Cin)
    x_cf = x51.reshape(C, HW)                            # (Cin, HW)

    flops = (2 * Cout * C * HW        # conv2d20 over the feature map
             + Cout * C               # gate fold into w3
             + 2 * C * Cmid * 2       # two squeeze matvecs
             + 4 * C + 2 * Cmid)      # bias / relu / clamp
    bytes_accessed = 4 * (x_cf.size + Cout * HW + w1t.size + w2t.size
                          + w3.size + b1.size + b2.size + pooled.size)

    out_cf = pl.pallas_call(
        se_block_kernel,
        out_shape=jax.ShapeDtypeStruct((Cout, HW), jnp.float32),
        grid=(1,),
        in_specs=[
            pl.BlockSpec((1, C), lambda i: (0, 0)),          # pooled row
            pl.BlockSpec((C, HW), lambda i: (0, 0)),         # full feature map
            pl.BlockSpec((C, Cmid), lambda i: (0, 0)),       # w1^T
            pl.BlockSpec((1, Cmid), lambda i: (0, 0)),       # b1 row
            pl.BlockSpec((Cmid, C), lambda i: (0, 0)),       # w2^T / 6
            pl.BlockSpec((1, C), lambda i: (0, 0)),          # b2/6 + 0.5 row
            pl.BlockSpec((Cout, C), lambda i: (0, 0)),       # w3
        ],
        out_specs=pl.BlockSpec((Cout, HW), lambda i: (0, 0)),
        compiler_params=pltpu.CompilerParams(
            dimension_semantics=("arbitrary",)),
        cost_estimate=pl.CostEstimate(flops=flops, transcendentals=0,
                                      bytes_accessed=bytes_accessed),
    )(pooled, x_cf, w1t, b1, w2t, b2, w3)

    return out_cf.reshape(N, Cout, H, W)   # free reshape (already channels-first)


def reference_forward(x52, x51, params):
    """Plain-JAX reference of the PyTorch module forward (NCHW semantics)."""
    N, C, H, W = x51.shape
    pooled = x52.reshape(C)                                       # (C,)
    h = jnp.maximum(params["w1"] @ pooled + params["b1"][:, 0], 0.0)
    g = params["w2"] @ h + params["b2"][:, 0]
    g = jnp.clip(g / 6.0 + 0.5, 0.0, 1.0)                         # (C,)
    scaled = x51 * g.reshape(1, C, 1, 1)                          # (1, C, H, W)
    return jnp.einsum("oc,nchw->nohw", params["w3"], scaled)


def init_params(key):
    """Deterministic init.  All conv weights in PyTorch-native (Cout, Cin)."""
    k1, k2, k3, k4, k5 = jax.random.split(key, 5)
    s1 = 1.0 / jnp.sqrt(240.0)
    s2 = 1.0 / jnp.sqrt(64.0)
    w1 = jax.random.uniform(k1, (64, 240), jnp.float32, -1.0, 1.0) * s1
    b1 = jax.random.uniform(k2, (64, 1), jnp.float32, -1.0, 1.0) * s1
    w2 = jax.random.uniform(k3, (240, 64), jnp.float32, -1.0, 1.0) * s2
    b2 = jax.random.uniform(k4, (240, 1), jnp.float32, -1.0, 1.0) * s2
    w3 = jax.random.uniform(k5, (40, 240), jnp.float32, -1.0, 1.0) * s1
    return {"w1": w1, "b1": b1, "w2": w2, "b2": b2, "w3": w3}


if __name__ == "__main__":
    key = jax.random.PRNGKey(0)
    k_params, k_x51, k_x52 = jax.random.split(key, 3)

    params = init_params(k_params)
    # shapes exactly as the module's forward implies
    x51 = jax.random.normal(k_x51, (1, 240, 14, 14), jnp.float32)
    x52 = jax.random.normal(k_x52, (1, 240, 1, 1), jnp.float32)

    out = se_block_forward(x52, x51, params)
    out = jax.block_until_ready(out)

    assert out.shape == (1, 40, 14, 14), out.shape

    ref = jax.block_until_ready(reference_forward(x52, x51, params))
    assert jnp.allclose(out, ref, atol=1e-3, rtol=1e-3), (
        float(jnp.max(jnp.abs(out - ref))))

    print("KERNEL_OK")
</pallas_src>

<mosaic_0001>
module attributes {stable_mosaic.version = 11 : i64} {
  func.func @se_block_kernel(%arg0: i32, %arg1: memref<1x240xf32, #tpu.memory_space<vmem>>, %arg2: memref<240x196xf32, #tpu.memory_space<vmem>>, %arg3: memref<240x64xf32, #tpu.memory_space<vmem>>, %arg4: memref<1x64xf32, #tpu.memory_space<vmem>>, %arg5: memref<64x240xf32, #tpu.memory_space<vmem>>, %arg6: memref<1x240xf32, #tpu.memory_space<vmem>>, %arg7: memref<40x240xf32, #tpu.memory_space<vmem>>, %arg8: memref<40x196xf32, #tpu.memory_space<vmem>>) attributes {dimension_semantics = [#tpu.dimension_semantics<arbitrary>], iteration_bounds = array<i64: 1>, scalar_prefetch = 0 : i64, scratch_operands = 0 : i64, tpu.core_type = #tpu.core_type<tc>, window_params = [{pipeline_mode = #tpu.pipeline_mode<synchronous>, transform_indices = @transform_0, window_bounds = array<i64: 1, 240>}, {pipeline_mode = #tpu.pipeline_mode<synchronous>, transform_indices = @transform_1, window_bounds = array<i64: 240, 196>}, {pipeline_mode = #tpu.pipeline_mode<synchronous>, transform_indices = @transform_2, window_bounds = array<i64: 240, 64>}, {pipeline_mode = #tpu.pipeline_mode<synchronous>, transform_indices = @transform_3, window_bounds = array<i64: 1, 64>}, {pipeline_mode = #tpu.pipeline_mode<synchronous>, transform_indices = @transform_4, window_bounds = array<i64: 64, 240>}, {pipeline_mode = #tpu.pipeline_mode<synchronous>, transform_indices = @transform_5, window_bounds = array<i64: 1, 240>}, {pipeline_mode = #tpu.pipeline_mode<synchronous>, transform_indices = @transform_6, window_bounds = array<i64: 40, 240>}, {pipeline_mode = #tpu.pipeline_mode<synchronous>, transform_indices = @transform_7, window_bounds = array<i64: 40, 196>}]} {
    %c0 = arith.constant 0 : index
    %c0_0 = arith.constant 0 : index
    %0 = vector.load %arg1[%c0, %c0_0] : memref<1x240xf32, #tpu.memory_space<vmem>>, vector<1x240xf32>
    %c0_1 = arith.constant 0 : index
    %c0_2 = arith.constant 0 : index
    %1 = vector.load %arg3[%c0_1, %c0_2] : memref<240x64xf32, #tpu.memory_space<vmem>>, vector<240x64xf32>
    %cst = arith.constant dense<0.000000e+00> : vector<1x64xf32>
    %2 = tpu.matmul %0, %1, %cst {dimension_numbers = #tpu.dot_dimension_numbers<[1], [0], [0], [1], [0, 0, 1, 1], [], []>} : vector<1x240xf32>, vector<240x64xf32>, vector<1x64xf32> -> vector<1x64xf32>
    %c0_3 = arith.constant 0 : index
    %c0_4 = arith.constant 0 : index
    %3 = vector.load %arg4[%c0_3, %c0_4] : memref<1x64xf32, #tpu.memory_space<vmem>>, vector<1x64xf32>
    %4 = arith.addf %2, %3 : vector<1x64xf32>
    %cst_5 = arith.constant 0.000000e+00 : f32
    %5 = vector.broadcast %cst_5 : f32 to vector<1x64xf32>
    %6 = arith.maximumf %4, %5 : vector<1x64xf32>
    %c0_6 = arith.constant 0 : index
    %c0_7 = arith.constant 0 : index
    %7 = vector.load %arg5[%c0_6, %c0_7] : memref<64x240xf32, #tpu.memory_space<vmem>>, vector<64x240xf32>
    %cst_8 = arith.constant dense<0.000000e+00> : vector<1x240xf32>
    %8 = tpu.matmul %6, %7, %cst_8 {dimension_numbers = #tpu.dot_dimension_numbers<[1], [0], [0], [1], [0, 0, 1, 1], [], []>} : vector<1x64xf32>, vector<64x240xf32>, vector<1x240xf32> -> vector<1x240xf32>
    %c0_9 = arith.constant 0 : index
    %c0_10 = arith.constant 0 : index
    %9 = vector.load %arg6[%c0_9, %c0_10] : memref<1x240xf32, #tpu.memory_space<vmem>>, vector<1x240xf32>
    %10 = arith.addf %8, %9 : vector<1x240xf32>
    %cst_11 = arith.constant 0.000000e+00 : f32
    %cst_12 = arith.constant 1.000000e+00 : f32
    %11 = vector.broadcast %cst_11 : f32 to vector<1x240xf32>
    %12 = arith.maximumf %11, %10 : vector<1x240xf32>
    %13 = vector.broadcast %cst_12 : f32 to vector<1x240xf32>
    %14 = arith.minimumf %13, %12 : vector<1x240xf32>
    %c0_13 = arith.constant 0 : index
    %c0_14 = arith.constant 0 : index
    %15 = vector.load %arg7[%c0_13, %c0_14] : memref<40x240xf32, #tpu.memory_space<vmem>>, vector<40x240xf32>
    %16 = vector.broadcast %14 : vector<1x240xf32> to vector<40x240xf32>
    %17 = arith.mulf %15, %16 : vector<40x240xf32>
    %c0_15 = arith.constant 0 : index
    %c0_16 = arith.constant 0 : index
    %18 = vector.load %arg2[%c0_15, %c0_16] : memref<240x196xf32, #tpu.memory_space<vmem>>, vector<240x196xf32>
    %cst_17 = arith.constant dense<0.000000e+00> : vector<40x196xf32>
    %19 = tpu.matmul %17, %18, %cst_17 {dimension_numbers = #tpu.dot_dimension_numbers<[1], [0], [0], [1], [0, 0, 1, 1], [], []>} : vector<40x240xf32>, vector<240x196xf32>, vector<40x196xf32> -> vector<40x196xf32>
    %c0_18 = arith.constant 0 : index
    %c0_19 = arith.constant 0 : index
    %20 = vector.load %arg8[%c0_18, %c0_19] : memref<40x196xf32, #tpu.memory_space<vmem>>, vector<40x196xf32>
    tpu.vector_store %arg8[%c0_18, %c0_19], %19 {strides = array<i32>} : memref<40x196xf32, #tpu.memory_space<vmem>>, vector<40x196xf32>,
    return
  }
  func.func @transform_0(%arg0: i32) -> (i32, i32) {
    %c0_i32 = arith.constant 0 : i32
    %c0_i32_0 = arith.constant 0 : i32
    %c0_i32_1 = arith.constant 0 : i32
    return %c0_i32, %c0_i32_0 : i32, i32
  }
  func.func @transform_1(%arg0: i32) -> (i32, i32) {
    %c0_i32 = arith.constant 0 : i32
    %c0_i32_0 = arith.constant 0 : i32
    %c0_i32_1 = arith.constant 0 : i32
    return %c0_i32, %c0_i32_0 : i32, i32
  }
  func.func @transform_2(%arg0: i32) -> (i32, i32) {
    %c0_i32 = arith.constant 0 : i32
    %c0_i32_0 = arith.constant 0 : i32
    %c0_i32_1 = arith.constant 0 : i32
    return %c0_i32, %c0_i32_0 : i32, i32
  }
  func.func @transform_3(%arg0: i32) -> (i32, i32) {
    %c0_i32 = arith.constant 0 : i32
    %c0_i32_0 = arith.constant 0 : i32
    %c0_i32_1 = arith.constant 0 : i32
    return %c0_i32, %c0_i32_0 : i32, i32
  }
  func.func @transform_4(%arg0: i32) -> (i32, i32) {
    %c0_i32 = arith.constant 0 : i32
    %c0_i32_0 = arith.constant 0 : i32
    %c0_i32_1 = arith.constant 0 : i32
    return %c0_i32, %c0_i32_0 : i32, i32
  }
  func.func @transform_5(%arg0: i32) -> (i32, i32) {
    %c0_i32 = arith.constant 0 : i32
    %c0_i32_0 = arith.constant 0 : i32
    %c0_i32_1 = arith.constant 0 : i32
    return %c0_i32, %c0_i32_0 : i32, i32
  }
  func.func @transform_6(%arg0: i32) -> (i32, i32) {
    %c0_i32 = arith.constant 0 : i32
    %c0_i32_0 = arith.constant 0 : i32
    %c0_i32_1 = arith.constant 0 : i32
    return %c0_i32, %c0_i32_0 : i32, i32
  }
  func.func @transform_7(%arg0: i32) -> (i32, i32) {
    %c0_i32 = arith.constant 0 : i32
    %c0_i32_0 = arith.constant 0 : i32
    %c0_i32_1 = arith.constant 0 : i32
    return %c0_i32, %c0_i32_0 : i32, i32
  }
}

</mosaic_0001>

<llo_original>
// kernel: tpu_custom_call.1
$region0: #{tpu_custom_call.1}
  #allocation0 [shape = 'u32[]', space=smem, size = 0x4, offset = 0x4, fixed_abs, tag = 'smem constant byte address 0x4 - core index']
  #allocation1 [shape = 'u32[144,128]{1,0:T(1,128)}', space=vmem, size = 0x12000, scoped, tag = 'internal scratch']
  %s0 = inlined_call_operand.vmem [shape: f32[1,240], index: 0, kind: input, shape index: {}]
  %s1 = inlined_call_operand.vmem [shape: f32[240,196], index: 1, kind: input, shape index: {}]
  %s2 = inlined_call_operand.vmem [shape: f32[240,64], index: 2, kind: input, shape index: {}]
  %s3 = inlined_call_operand.vmem [shape: f32[1,64], index: 3, kind: input, shape index: {}]
  %s4 = inlined_call_operand.vmem [shape: f32[64,240], index: 4, kind: input, shape index: {}]
  %s5 = inlined_call_operand.vmem [shape: f32[1,240], index: 5, kind: input, shape index: {}]
  %s6 = inlined_call_operand.vmem [shape: f32[40,240], index: 6, kind: input, shape index: {}]
  %s7 = inlined_call_operand.hbm [shape: f32[40,196], index: 7, kind: output, shape index: {}]
  %s8 = sld [smem:[#allocation0]]
  $region38: #{tpu_custom_call.1} parent=0
    _
  %s10 = ssub.s32 1, %s8
  %s11 = scalar_select 0, %s10, %s8
  $region1: #{tpu_custom_call.1} parent=0
    #allocation2 [shape = 'u8[40960]{0}', space=vmem, size = 0xa000, scoped, tag = 'output window, operand 0, single buffered']
    #allocation3 [shape = 's32[1]{0}', space=sflag, size = 0x4, scoped, tag = 'scoped memory for tpu_custom_call.1']
    %12 = vsyncpa [#allocation3], 0
    // Predicated region
    $region2: #{tpu_custom_call.1} parent=1 // pred_check
      _
    $region3: #{tpu_custom_call.1} parent=1 // pred_check_branch
      %14 = sbr.rel (0) target = $region5
    $region4: #{tpu_custom_call.1} parent=1 // pred_region
      _
    $region5: #{tpu_custom_call.1} parent=1 // pred_fallthru
      _
    // Predicated region
    $region6: #{tpu_custom_call.1} parent=1 // pred_check
      _
    $region7: #{tpu_custom_call.1} parent=1 // pred_check_branch
      %16 = sbr.rel (0) target = $region9
    $region8: #{tpu_custom_call.1} parent=1 // pred_region
      _
    $region9: #{tpu_custom_call.1} parent=1 // pred_fallthru
      _
    // Predicated region
    $region10: #{tpu_custom_call.1} parent=1 // pred_check
      _
    $region11: #{tpu_custom_call.1} parent=1 // pred_check_branch
      %18 = sbr.rel (0) target = $region13
    $region12: #{tpu_custom_call.1} parent=1 // pred_region
      _
    $region13: #{tpu_custom_call.1} parent=1 // pred_fallthru
      _
    // Predicated region
    $region14: #{tpu_custom_call.1} parent=1 // pred_check
      _
    $region15: #{tpu_custom_call.1} parent=1 // pred_check_branch
      %20 = sbr.rel (0) target = $region17
    $region16: #{tpu_custom_call.1} parent=1 // pred_region
      _
    $region17: #{tpu_custom_call.1} parent=1 // pred_fallthru
      _
    // Predicated region
    $region18: #{tpu_custom_call.1} parent=1 // pred_check
      _
    $region19: #{tpu_custom_call.1} parent=1 // pred_check_branch
      %22 = sbr.rel (0) target = $region21
    $region20: #{tpu_custom_call.1} parent=1 // pred_region
      _
    $region21: #{tpu_custom_call.1} parent=1 // pred_fallthru
      _
    // Predicated region
    $region22: #{tpu_custom_call.1} parent=1 // pred_check
      _
    $region23: #{tpu_custom_call.1} parent=1 // pred_check_branch
      %24 = sbr.rel (0) target = $region25
    $region24: #{tpu_custom_call.1} parent=1 // pred_region
      _
    $region25: #{tpu_custom_call.1} parent=1 // pred_fallthru
      _
    // Predicated region
    $region26: #{tpu_custom_call.1} parent=1 // pred_check
      _
    $region27: #{tpu_custom_call.1} parent=1 // pred_check_branch
      %26 = sbr.rel (0) target = $region29
    $region28: #{tpu_custom_call.1} parent=1 // pred_region
      _
    $region29: #{tpu_custom_call.1} parent=1 // pred_fallthru
      _
    %v27 = vld [vmem:[%s0] sm:$0x3]
    %v28 = vld [vmem:[%s2] sm:$0xff]
    %v29 = vld [vmem:[%s2 + $0x8] sm:$0xff]
    %v30 = vld [vmem:[%s2 + $0x10] sm:$0xff]
    %v31 = vld [vmem:[%s2 + $0x18] sm:$0xff]
    %v32 = vld [vmem:[%s2 + $0x20] sm:$0xff]
    %v33 = vld [vmem:[%s2 + $0x28] sm:$0xff]
    %v34 = vld [vmem:[%s2 + $0x30] sm:$0xff]
    %v35 = vld [vmem:[%s2 + $0x38] sm:$0xff]
    %v36 = vld [vmem:[%s2 + $0x40] sm:$0xff]
    %v37 = vld [vmem:[%s2 + $0x48] sm:$0xff]
    %v38 = vld [vmem:[%s2 + $0x50] sm:$0xff]
    %v39 = vld [vmem:[%s2 + $0x58] sm:$0xff]
    %v40 = vld [vmem:[%s2 + $0x60] sm:$0xff]
    %v41 = vld [vmem:[%s2 + $0x68] sm:$0xff]
    %v42 = vld [vmem:[%s2 + $0x70] sm:$0xff]
    %v43 = vld [vmem:[%s2 + $0x78] sm:$0xff]
    %v44 = vld [vmem:[%s2 + $0x80] sm:$0xff]
    %v45 = vld [vmem:[%s2 + $0x88] sm:$0xff]
    %v46 = vld [vmem:[%s2 + $0x90] sm:$0xff]
    %v47 = vld [vmem:[%s2 + $0x98] sm:$0xff]
    %v48 = vld [vmem:[%s2 + $0xa0] sm:$0xff]
    %v49 = vld [vmem:[%s2 + $0xa8] sm:$0xff]
    %v50 = vld [vmem:[%s2 + $0xb0] sm:$0xff]
    %v51 = vld [vmem:[%s2 + $0xb8] sm:$0xff]
    %v52 = vld [vmem:[%s2 + $0xc0] sm:$0xff]
    %v53 = vld [vmem:[%s2 + $0xc8] sm:$0xff]
    %v54 = vld [vmem:[%s2 + $0xd0] sm:$0xff]
    %v55 = vld [vmem:[%s2 + $0xd8] sm:$0xff]
    %v56 = vld [vmem:[%s2 + $0xe0] sm:$0xff]
    %v57 = vld [vmem:[%s2 + $0xe8] sm:$0xff]
    %v58 = vld [vmem:[%s3] sm:$0x1]
    %v60 = vlaneseq
    %v61 = vshrl.u32 %v60, 7
    %v62 = vsub.s32 0, %v61
    %v63 = vrot.slane %v27, %v62
    %v64 = vlaneseq
    %v65 = vshrl.u32 %v64, 7
    %v66 = vsub.s32 1, %v65
    %v67 = vrot.slane %v27, %v66
    %vm69 = vcmask 916480
    %v70 = vsel %vm69, %v67, 0
    %72 = vmatprep.subr.mxu0 0.0
    %73 = vmatpush1.msra.mxu0 %v28
    %74 = vmatprep.subr.mxu0 0.0
    %75 = vmatpush1.msra.mxu0 %v29
    %76 = vmatprep.subr.mxu0 0.0
    %77 = vmatpush1.msra.mxu0 %v30
    %78 = vmatprep.subr.mxu0 0.0
    %79 = vmatpush1.msra.mxu0 %v31
    %80 = vmatprep.subr.mxu0 0.0
    %81 = vmatpush1.msra.mxu0 %v32
    %82 = vmatprep.subr.mxu0 0.0
    %83 = vmatpush1.msra.mxu0 %v33
    %84 = vmatprep.subr.mxu0 0.0
    %85 = vmatpush1.msra.mxu0 %v34
    %86 = vmatprep.subr.mxu0 0.0
    %87 = vmatpush1.msra.mxu0 %v35
    %88 = vmatprep.subr.mxu0 0.0
    %89 = vmatpush1.msra.mxu0 %v36
    %90 = vmatprep.subr.mxu0 0.0
    %91 = vmatpush1.msra.mxu0 %v37
    %92 = vmatprep.subr.mxu0 0.0
    %93 = vmatpush1.msra.mxu0 %v38
    %94 = vmatprep.subr.mxu0 0.0
    %95 = vmatpush1.msra.mxu0 %v39
    %96 = vmatprep.subr.mxu0 0.0
    %97 = vmatpush1.msra.mxu0 %v40
    %98 = vmatprep.subr.mxu0 0.0
    %99 = vmatpush1.msra.mxu0 %v41
    %100 = vmatprep.subr.mxu0 0.0
    %101 = vmatpush1.msra.mxu0 %v42
    %102 = vmatprep.subr.mxu0 0.0
    %103 = vmatpush1.msra.mxu0 %v43
    %104 = vmatprep.subr.mxu0 0.0
    %105 = vmatpush1.msra.mxu0 %v44
    %106 = vmatprep.subr.mxu0 0.0
    %107 = vmatpush1.msra.mxu0 %v45
    %108 = vmatprep.subr.mxu0 0.0
    %109 = vmatpush1.msra.mxu0 %v46
    %110 = vmatprep.subr.mxu0 0.0
    %111 = vmatpush1.msra.mxu0 %v47
    %112 = vmatprep.subr.mxu0 0.0
    %113 = vmatpush1.msra.mxu0 %v48
    %114 = vmatprep.subr.mxu0 0.0
    %115 = vmatpush1.msra.mxu0 %v49
    %116 = vmatprep.subr.mxu0 0.0
    %117 = vmatpush1.msra.mxu0 %v50
    %118 = vmatprep.subr.mxu0 0.0
    %119 = vmatpush1.msra.mxu0 %v51
    %120 = vmatprep.subr.mxu0 0.0
    %121 = vmatpush1.msra.mxu0 %v52
    %122 = vmatprep.subr.mxu0 0.0
    %123 = vmatpush1.msra.mxu0 %v53
    %124 = vmatprep.subr.mxu0 0.0
    %125 = vmatpush1.msra.mxu0 %v54
    %126 = vmatprep.subr.mxu0 0.0
    %127 = vmatpush1.msra.mxu0 %v55
    %128 = vmatprep.subr.mxu0 0.0
    %129 = vmatpush1.msra.mxu0 %v56
    %130 = vmatprep.subr.mxu0 0.0
    %131 = vmatpush1.msra.mxu0 %v57
    %132 = vmatprep.subr.mxu0 0.0
    %133 = vmatpush1.msra.mxu0 0.0
    %134 = vmatprep.subr.mxu0 0.0
    %135 = vmatpush1.msra.mxu0 0.0
    %136 = vmatprep.mubr.f32.mxu0 %v70
    %137 = vmatmul.mubr.f32.gmra.mrb[0].mxu0 %v63
    %v138 = vpop.f32.mrb[0].mxu0
    %v139 = vadd.f32 %v58, %v138
    %v140 = vpop.f32.mrb[0].mxu0
    %141 = vdwg.mxu0
    %v142 = vmax.f32 %v139, 0.0
    %v143 = vld [vmem:[%s4] sm:$0xff]
    %v144 = vld [vmem:[%s4 + $0x8] sm:$0xff]
    %v145 = vld [vmem:[%s4 + $0x10] sm:$0xff]
    %v146 = vld [vmem:[%s4 + $0x18] sm:$0xff]
    %v147 = vld [vmem:[%s4 + $0x20] sm:$0xff]
    %v148 = vld [vmem:[%s4 + $0x28] sm:$0xff]
    %v149 = vld [vmem:[%s4 + $0x30] sm:$0xff]
    %v150 = vld [vmem:[%s4 + $0x38] sm:$0xff]
    %v151 = vld [vmem:[%s4 + $0x40] sm:$0xff]
    %v152 = vld [vmem:[%s4 + $0x48] sm:$0xff]
    %v153 = vld [vmem:[%s4 + $0x50] sm:$0xff]
    %v154 = vld [vmem:[%s4 + $0x58] sm:$0xff]
    %v155 = vld [vmem:[%s4 + $0x60] sm:$0xff]
    %v156 = vld [vmem:[%s4 + $0x68] sm:$0xff]
    %v157 = vld [vmem:[%s4 + $0x70] sm:$0xff]
    %v158 = vld [vmem:[%s4 + $0x78] sm:$0xff]
    %v159 = vld [vmem:[%s5] sm:$0x3]
    %v161 = vlaneseq
    %v162 = vshrl.u32 %v161, 7
    %v163 = vsub.s32 0, %v162
    %v164 = vrot.slane %v159, %v163
    %v165 = vlaneseq
    %v166 = vshrl.u32 %v165, 7
    %v167 = vsub.s32 1, %v166
    %v168 = vrot.slane %v159, %v167
    %vm171 = vcmask 523264
    %v173 = vsel %vm171, %v142, 0
    %175 = vmatprep.subr.mxu0 %v144
    %176 = vmatpush1.msra.mxu0 %v143
    %177 = vmatprep.subr.mxu0 %v146
    %178 = vmatpush1.msra.mxu0 %v145
    %179 = vmatprep.subr.mxu0 %v148
    %180 = vmatpush1.msra.mxu0 %v147
    %181 = vmatprep.subr.mxu0 %v150
    %182 = vmatpush1.msra.mxu0 %v149
    %183 = vmatprep.subr.mxu0 %v152
    %184 = vmatpush1.msra.mxu0 %v151
    %185 = vmatprep.subr.mxu0 %v154
    %186 = vmatpush1.msra.mxu0 %v153
    %187 = vmatprep.subr.mxu0 %v156
    %188 = vmatpush1.msra.mxu0 %v155
    %189 = vmatprep.subr.mxu0 %v158
    %190 = vmatpush1.msra.mxu0 %v157
    %191 = vmatprep.subr.mxu0 0.0
    %192 = vmatpush1.msra.mxu0 0.0
    %193 = vmatprep.subr.mxu0 0.0
    %194 = vmatpush1.msra.mxu0 0.0
    %195 = vmatprep.subr.mxu0 0.0
    %196 = vmatpush1.msra.mxu0 0.0
    %197 = vmatprep.subr.mxu0 0.0
    %198 = vmatpush1.msra.mxu0 0.0
    %199 = vmatprep.subr.mxu0 0.0
    %200 = vmatpush1.msra.mxu0 0.0
    %201 = vmatprep.subr.mxu0 0.0
    %202 = vmatpush1.msra.mxu0 0.0
    %203 = vmatprep.subr.mxu0 0.0
    %204 = vmatpush1.msra.mxu0 0.0
    %205 = vmatprep.subr.mxu0 0.0
    %206 = vmatpush1.msra.mxu0 0.0
    %207 = vmatprep.subr.mxu0 0.0
    %208 = vmatpush1.msra.mxu0 0.0
    %209 = vmatprep.subr.mxu0 0.0
    %210 = vmatpush1.msra.mxu0 0.0
    %211 = vmatprep.subr.mxu0 0.0
    %212 = vmatpush1.msra.mxu0 0.0
    %213 = vmatprep.subr.mxu0 0.0
    %214 = vmatpush1.msra.mxu0 0.0
    %215 = vmatprep.subr.mxu0 0.0
    %216 = vmatpush1.msra.mxu0 0.0
    %217 = vmatprep.subr.mxu0 0.0
    %218 = vmatpush1.msra.mxu0 0.0
    %219 = vmatprep.subr.mxu0 0.0
    %220 = vmatpush1.msra.mxu0 0.0
    %221 = vmatprep.subr.mxu0 0.0
    %222 = vmatpush1.msra.mxu0 0.0
    %223 = vmatprep.subr.mxu0 0.0
    %224 = vmatpush1.msra.mxu0 0.0
    %225 = vmatprep.subr.mxu0 0.0
    %226 = vmatpush1.msra.mxu0 0.0
    %227 = vmatprep.subr.mxu0 0.0
    %228 = vmatpush1.msra.mxu0 0.0
    %229 = vmatprep.subr.mxu0 0.0
    %230 = vmatpush1.msra.mxu0 0.0
    %231 = vmatprep.subr.mxu0 0.0
    %232 = vmatpush1.msra.mxu0 0.0
    %233 = vmatprep.subr.mxu0 0.0
    %234 = vmatpush1.msra.mxu0 0.0
    %235 = vmatprep.subr.mxu0 0.0
    %236 = vmatpush1.msra.mxu0 0.0
    %237 = vmatprep.subr.mxu0 0.0
    %238 = vmatpush1.msra.mxu0 0.0
    %239 = vmatprep.mubr.f32.mxu0 0.0
    %240 = vmatmul.mubr.f32.gmra.mrb[0].mxu0 %v173
    %v241 = vpop.f32.mrb[0].mxu0
    %v242 = vadd.f32 %v164, %v241
    %v243 = vpop.f32.mrb[0].mxu0
    %v244 = vadd.f32 %v168, %v243
    %245 = vdwg.mxu0
    %v246 = vmax.f32 %v242, 0.0
    %v247 = vmax.f32 %v244, 0.0
    %v248 = vmin.f32 %v246, 1.0
    %v249 = vmin.f32 %v247, 1.0
    %v250 = vld [vmem:[%s6] sm:$0xff]
    %v251 = vld [vmem:[%s6 + $0x8] sm:$0xff]
    %v252 = vld [vmem:[%s6 + $0x10] sm:$0xff]
    %v253 = vld [vmem:[%s6 + $0x18] sm:$0xff]
    %v254 = vld [vmem:[%s6 + $0x20] sm:$0xff]
    %v255 = vld [vmem:[%s6 + $0x28] sm:$0xff]
    %v256 = vld [vmem:[%s6 + $0x30] sm:$0xff]
    %v257 = vld [vmem:[%s6 + $0x38] sm:$0xff]
    %v258 = vld [vmem:[%s6 + $0x40] sm:$0xff]
    %v259 = vld [vmem:[%s6 + $0x48] sm:$0xff]
    %v260 = vlaneseq
    %v261 = vshrl.u32 %v260, 7
    %v262 = vsub.s32 0, %v261
    %v263 = vrot.slane %v248, %v262
    %v264 = vlaneseq
    %v265 = vshrl.u32 %v264, 7
    %v266 = vsub.s32 0, %v265
    %v267 = vrot.slane %v249, %v266
    %v268 = vmul.f32 %v250, %v263
    %v269 = vmul.f32 %v251, %v267
    %v270 = vmul.f32 %v252, %v263
    %v271 = vmul.f32 %v253, %v267
    %v272 = vmul.f32 %v254, %v263
    %v273 = vmul.f32 %v255, %v267
    %v274 = vmul.f32 %v256, %v263
    %v275 = vmul.f32 %v257, %v267
    %v276 = vmul.f32 %v258, %v263
    %v277 = vmul.f32 %v259, %v267
    %v278 = vld [vmem:[%s1] sm:$0xff]
    %v279 = vld [vmem:[%s1 + $0x8] sm:$0xff]
    %v280 = vld [vmem:[%s1 + $0x10] sm:$0xff]
    %v281 = vld [vmem:[%s1 + $0x18] sm:$0xff]
    %v282 = vld [vmem:[%s1 + $0x20] sm:$0xff]
    %v283 = vld [vmem:[%s1 + $0x28] sm:$0xff]
    %v284 = vld [vmem:[%s1 + $0x30] sm:$0xff]
    %v285 = vld [vmem:[%s1 + $0x38] sm:$0xff]
    %v286 = vld [vmem:[%s1 + $0x40] sm:$0xff]
    %v287 = vld [vmem:[%s1 + $0x48] sm:$0xff]
    %v288 = vld [vmem:[%s1 + $0x50] sm:$0xff]
    %v289 = vld [vmem:[%s1 + $0x58] sm:$0xff]
    %v290 = vld [vmem:[%s1 + $0x60] sm:$0xff]
    %v291 = vld [vmem:[%s1 + $0x68] sm:$0xff]
    %v292 = vld [vmem:[%s1 + $0x70] sm:$0xff]
    %v293 = vld [vmem:[%s1 + $0x78] sm:$0xff]
    %v294 = vld [vmem:[%s1 + $0x80] sm:$0xff]
    %v295 = vld [vmem:[%s1 + $0x88] sm:$0xff]
    %v296 = vld [vmem:[%s1 + $0x90] sm:$0xff]
    %v297 = vld [vmem:[%s1 + $0x98] sm:$0xff]
    %v298 = vld [vmem:[%s1 + $0xa0] sm:$0xff]
    %v299 = vld [vmem:[%s1 + $0xa8] sm:$0xff]
    %v300 = vld [vmem:[%s1 + $0xb0] sm:$0xff]
    %v301 = vld [vmem:[%s1 + $0xb8] sm:$0xff]
    %v302 = vld [vmem:[%s1 + $0xc0] sm:$0xff]
    %v303 = vld [vmem:[%s1 + $0xc8] sm:$0xff]
    %v304 = vld [vmem:[%s1 + $0xd0] sm:$0xff]
    %v305 = vld [vmem:[%s1 + $0xd8] sm:$0xff]
    %v306 = vld [vmem:[%s1 + $0xe0] sm:$0xff]
    %v307 = vld [vmem:[%s1 + $0xe8] sm:$0xff]
    %v308 = vld [vmem:[%s1 + $0xf0] sm:$0xff]
    %v309 = vld [vmem:[%s1 + $0xf8] sm:$0xff]
    %v310 = vld [vmem:[%s1 + $0x100] sm:$0xff]
    %v311 = vld [vmem:[%s1 + $0x108] sm:$0xff]
    %v312 = vld [vmem:[%s1 + $0x110] sm:$0xff]
    %v313 = vld [vmem:[%s1 + $0x118] sm:$0xff]
    %v314 = vld [vmem:[%s1 + $0x120] sm:$0xff]
    %v315 = vld [vmem:[%s1 + $0x128] sm:$0xff]
    %v316 = vld [vmem:[%s1 + $0x130] sm:$0xff]
    %v317 = vld [vmem:[%s1 + $0x138] sm:$0xff]
    %v318 = vld [vmem:[%s1 + $0x140] sm:$0xff]
    %v319 = vld [vmem:[%s1 + $0x148] sm:$0xff]
    %v320 = vld [vmem:[%s1 + $0x150] sm:$0xff]
    %v321 = vld [vmem:[%s1 + $0x158] sm:$0xff]
    %v322 = vld [vmem:[%s1 + $0x160] sm:$0xff]
    %v323 = vld [vmem:[%s1 + $0x168] sm:$0xff]
    %v324 = vld [vmem:[%s1 + $0x170] sm:$0xff]
    %v325 = vld [vmem:[%s1 + $0x178] sm:$0xff]
    %v326 = vld [vmem:[%s1 + $0x180] sm:$0xff]
    %v327 = vld [vmem:[%s1 + $0x188] sm:$0xff]
    %v328 = vld [vmem:[%s1 + $0x190] sm:$0xff]
    %v329 = vld [vmem:[%s1 + $0x198] sm:$0xff]
    %v330 = vld [vmem:[%s1 + $0x1a0] sm:$0xff]
    %v331 = vld [vmem:[%s1 + $0x1a8] sm:$0xff]
    %v332 = vld [vmem:[%s1 + $0x1b0] sm:$0xff]
    %v333 = vld [vmem:[%s1 + $0x1b8] sm:$0xff]
    %v334 = vld [vmem:[%s1 + $0x1c0] sm:$0xff]
    %v335 = vld [vmem:[%s1 + $0x1c8] sm:$0xff]
    %v336 = vld [vmem:[%s1 + $0x1d0] sm:$0xff]
    %v337 = vld [vmem:[%s1 + $0x1d8] sm:$0xff]
    %v339 = vsel %vm69, %v269, 0
    %v342 = vsel %vm69, %v271, 0
    %v345 = vsel %vm69, %v273, 0
    %v348 = vsel %vm69, %v275, 0
    %v351 = vsel %vm69, %v277, 0
    %353 = vmatprep.subr.mxu0 %v279
    %354 = vmatpush1.msra.mxu0 %v278
    %355 = vmatprep.subr.mxu0 %v281
    %356 = vmatpush1.msra.mxu0 %v280
    %357 = vmatprep.subr.mxu0 %v283
    %358 = vmatpush1.msra.mxu0 %v282
    %359 = vmatprep.subr.mxu0 %v285
    %360 = vmatpush1.msra.mxu0 %v284
    %361 = vmatprep.subr.mxu0 %v287
    %362 = vmatpush1.msra.mxu0 %v286
    %363 = vmatprep.subr.mxu0 %v289
    %364 = vmatpush1.msra.mxu0 %v288
    %365 = vmatprep.subr.mxu0 %v291
    %366 = vmatpush1.msra.mxu0 %v290
    %367 = vmatprep.subr.mxu0 %v293
    %368 = vmatpush1.msra.mxu0 %v292
    %369 = vmatprep.subr.mxu0 %v295
    %370 = vmatpush1.msra.mxu0 %v294
    %371 = vmatprep.subr.mxu0 %v297
    %372 = vmatpush1.msra.mxu0 %v296
    %373 = vmatprep.subr.mxu0 %v299
    %374 = vmatpush1.msra.mxu0 %v298
    %375 = vmatprep.subr.mxu0 %v301
    %376 = vmatpush1.msra.mxu0 %v300
    %377 = vmatprep.subr.mxu0 %v303
    %378 = vmatpush1.msra.mxu0 %v302
    %379 = vmatprep.subr.mxu0 %v305
    %380 = vmatpush1.msra.mxu0 %v304
    %381 = vmatprep.subr.mxu0 %v307
    %382 = vmatpush1.msra.mxu0 %v306
    %383 = vmatprep.subr.mxu0 %v309
    %384 = vmatpush1.msra.mxu0 %v308
    %385 = vmatprep.subr.mxu0 %v311
    %386 = vmatpush1.msra.mxu0 %v310
    %387 = vmatprep.subr.mxu0 %v313
    %388 = vmatpush1.msra.mxu0 %v312
    %389 = vmatprep.subr.mxu0 %v315
    %390 = vmatpush1.msra.mxu0 %v314
    %391 = vmatprep.subr.mxu0 %v317
    %392 = vmatpush1.msra.mxu0 %v316
    %393 = vmatprep.subr.mxu0 %v319
    %394 = vmatpush1.msra.mxu0 %v318
    %395 = vmatprep.subr.mxu0 %v321
    %396 = vmatpush1.msra.mxu0 %v320
    %397 = vmatprep.subr.mxu0 %v323
    %398 = vmatpush1.msra.mxu0 %v322
    %399 = vmatprep.subr.mxu0 %v325
    %400 = vmatpush1.msra.mxu0 %v324
    %401 = vmatprep.subr.mxu0 %v327
    %402 = vmatpush1.msra.mxu0 %v326
    %403 = vmatprep.subr.mxu0 %v329
    %404 = vmatpush1.msra.mxu0 %v328
    %405 = vmatprep.subr.mxu0 %v331
    %406 = vmatpush1.msra.mxu0 %v330
    %407 = vmatprep.subr.mxu0 %v333
    %408 = vmatpush1.msra.mxu0 %v332
    %409 = vmatprep.subr.mxu0 %v335
    %410 = vmatpush1.msra.mxu0 %v334
    %411 = vmatprep.subr.mxu0 %v337
    %412 = vmatpush1.msra.mxu0 %v336
    %413 = vmatprep.subr.mxu0 0.0
    %414 = vmatpush1.msra.mxu0 0.0
    %415 = vmatprep.subr.mxu0 0.0
    %416 = vmatpush1.msra.mxu0 0.0
    %417 = vmatprep.mubr.f32.mxu0 %v339
    %418 = vmatmul.mubr.f32.gmra.mrb[0].mxu0 %v268
    %v419 = vpop.f32.mrb[0].mxu0
    %v420 = vadd.f32 0.0, %v419
    %v421 = vpop.f32.mrb[0].mxu0
    %v422 = vadd.f32 0.0, %v421
    %423 = vmatprep.mubr.f32.mxu0 %v342
    %424 = vmatmul.mubr.f32.gmra.mrb[0].mxu0 %v270
    %v425 = vpop.f32.mrb[0].mxu0
    %v426 = vadd.f32 0.0, %v425
    %v427 = vpop.f32.mrb[0].mxu0
    %v428 = vadd.f32 0.0, %v427
    %429 = vmatprep.mubr.f32.mxu0 %v345
    %430 = vmatmul.mubr.f32.gmra.mrb[0].mxu0 %v272
    %v431 = vpop.f32.mrb[0].mxu0
    %v432 = vadd.f32 0.0, %v431
    %v433 = vpop.f32.mrb[0].mxu0
    %v434 = vadd.f32 0.0, %v433
    %435 = vmatprep.mubr.f32.mxu0 %v348
    %436 = vmatmul.mubr.f32.gmra.mrb[0].mxu0 %v274
    %v437 = vpop.f32.mrb[0].mxu0
    %v438 = vadd.f32 0.0, %v437
    %v439 = vpop.f32.mrb[0].mxu0
    %v440 = vadd.f32 0.0, %v439
    %441 = vmatprep.mubr.f32.mxu0 %v351
    %442 = vmatmul.mubr.f32.gmra.mrb[0].mxu0 %v276
    %v443 = vpop.f32.mrb[0].mxu0
    %v444 = vadd.f32 0.0, %v443
    %v445 = vpop.f32.mrb[0].mxu0
    %v446 = vadd.f32 0.0, %v445
    %447 = vdwg.mxu0
    %448 = vst [vmem:[#allocation2] sm:$0xff] %v420
    %vm449 = vcmask 556032
    %450 = vst.msk [vmem:[#allocation2 + $0x8] sm:$0xff] %vm449, %v422
    %451 = vst [vmem:[#allocation2 + $0x10] sm:$0xff] %v426
    %452 = vst.msk [vmem:[#allocation2 + $0x18] sm:$0xff] %vm449, %v428
    %453 = vst [vmem:[#allocation2 + $0x20] sm:$0xff] %v432
    %454 = vst.msk [vmem:[#allocation2 + $0x28] sm:$0xff] %vm449, %v434
    %455 = vst [vmem:[#allocation2 + $0x30] sm:$0xff] %v438
    %456 = vst.msk [vmem:[#allocation2 + $0x38] sm:$0xff] %vm449, %v440
    %457 = vst [vmem:[#allocation2 + $0x40] sm:$0xff] %v444
    %458 = vst.msk [vmem:[#allocation2 + $0x48] sm:$0xff] %vm449, %v446
    // Predicated region
    $region30: #{tpu_custom_call.1} parent=1 // pred_check
      _
    $region31: #{tpu_custom_call.1} parent=1 // pred_check_branch
      %460 = sbr.rel (0) target = $region33
    $region32: #{tpu_custom_call.1} parent=1 // pred_region
      %s462 = ssub.s32 1280, 1280
      %463 = vsyncadd [#allocation3], %s462
      %s464 = sshll.u32 [#allocation2], 4
      %s465 = int_to_ptr.vmem [resolvable:$true] %s464
      %470 = dma.vmem_to_hbm [thread:$0]  %s465, 1280, %s7, [#allocation3], 256, 256, 16
    $region33: #{tpu_custom_call.1} parent=1 // pred_fallthru
      _
    // Predicated region
    $region34: #{tpu_custom_call.1} parent=1 // pred_check
      _
    $region35: #{tpu_custom_call.1} parent=1 // pred_check_branch
      %472 = sbr.rel (0) target = $region37
    $region36: #{tpu_custom_call.1} parent=1 // pred_region
      %473 = dma.done [#allocation3], 1280
    $region37: #{tpu_custom_call.1} parent=1 // pred_fallthru
      _
    %474 = vsyncpa [#allocation3], 1

</llo_original>
